<compile_context>
chip_gen: v6e
topology: v6e:2x2x1
jax: 0.10.0
libtpu: 0.0.40
codegen_flags: <defaults>
</compile_context>

<pallas_src>
import functools

import jax
import jax.numpy as jnp
import numpy as np
from jax.experimental import pallas as pl
from jax.experimental.pallas import tpu as pltpu

LANES = 128        # TPU lane width (only layer-4's output dim is padded to this)
SUBLANES = 16      # batch padding granularity (bf16 sublane packing)
TB_MAX = 1024      # max batch-tile rows
NEG_INF = -1e30    # bias for padded action lanes -> exp() underflows to exactly 0

H1, H2, H3 = 256, 128, 64


def _round_up(n, m):
    return ((n + m - 1) // m) * m


def _cdiv(a, b):
    return (a + b - 1) // b


def _policy_kernel(x_ref,
                   w1_ref, b1_ref,
                   w2_ref, b2_ref,
                   w3_ref, b3_ref,
                   w4_ref, b4_ref,
                   o_ref, *, num_actions):
    """One batch tile: 4x (matmul + bias [+ ReLU]) + softmax, store real columns only.

    Weights are bf16 and VMEM-resident across the grid (constant index_maps);
    activations are cast back to bf16 between layers so every dot runs the MXU
    at its native bf16 rate with f32 accumulation.
    """
    x = x_ref[...].astype(jnp.bfloat16)                                 # (TB, state_dim)

    h = jnp.dot(x, w1_ref[...], preferred_element_type=jnp.float32) + b1_ref[...]
    h = jnp.maximum(h, 0.0).astype(jnp.bfloat16)                        # (TB, 256)

    h = jnp.dot(h, w2_ref[...], preferred_element_type=jnp.float32) + b2_ref[...]
    h = jnp.maximum(h, 0.0).astype(jnp.bfloat16)                        # (TB, 128)

    h = jnp.dot(h, w3_ref[...], preferred_element_type=jnp.float32) + b3_ref[...]
    h = jnp.maximum(h, 0.0).astype(jnp.bfloat16)                        # (TB, 64)

    logits = (jnp.dot(h, w4_ref[...], preferred_element_type=jnp.float32)
              + b4_ref[...])                                            # (TB, 128)

    # Padded action lanes carry a -1e30 bias: they never win the max and add
    # exactly 0 to the denominator, so the softmax over the real lanes is exact.
    m = jnp.max(logits, axis=-1, keepdims=True)
    e = jnp.exp(logits - m)
    denom = jnp.sum(e, axis=-1, keepdims=True)
    probs = e * pl.reciprocal(denom, approx=True)
    # Store only the real action columns (output slab is (B, action_dim)).
    o_ref[...] = probs[:, :num_actions].astype(o_ref.dtype)


def init_params(key, state_dim, action_dim):
    """PyTorch-Linear-style init (U[-1/sqrt(in), 1/sqrt(in)]), weights as (in, out)."""
    dims = [(state_dim, H1), (H1, H2), (H2, H3), (H3, action_dim)]
    params = {}
    keys = jax.random.split(key, 2 * len(dims))
    for i, (fin, fout) in enumerate(dims):
        bound = 1.0 / np.sqrt(fin)
        params[f"w{i + 1}"] = jax.random.uniform(
            keys[2 * i], (fin, fout), jnp.float32, minval=-bound, maxval=bound)
        params[f"b{i + 1}"] = jax.random.uniform(
            keys[2 * i + 1], (1, fout), jnp.float32, minval=-bound, maxval=bound)
    return params


def prepare_params(params, state_dim, action_dim):
    """One-time bf16 cast of the weights; only layer-4's output dim is lane-padded."""
    adp = _round_up(action_dim, LANES)                      # 8 -> 128
    w4 = jnp.pad(params["w4"], ((0, 0), (0, adp - action_dim)))
    b4 = jnp.pad(params["b4"], ((0, 0), (0, adp - action_dim)),
                 constant_values=NEG_INF)
    return {
        "w1": params["w1"].astype(jnp.bfloat16),            # (state_dim, 256) unpadded
        "b1": params["b1"].astype(jnp.float32),
        "w2": params["w2"].astype(jnp.bfloat16),            # (256, 128)
        "b2": params["b2"].astype(jnp.float32),
        "w3": params["w3"].astype(jnp.bfloat16),            # (128, 64) unpadded
        "b3": params["b3"].astype(jnp.float32),
        "w4": w4.astype(jnp.bfloat16),                      # (64, 128): N padded only
        "b4": b4.astype(jnp.float32),                       # padded lanes = -1e30
    }


@functools.partial(jax.jit, static_argnames=("action_dim",))
def smart_policy_forward(x, pparams, action_dim):
    """x: (B, state_dim) f32; pparams: output of prepare_params. Returns (B, action_dim) f32."""
    b, state_dim = x.shape
    adp = pparams["w4"].shape[1]

    # --- batch tiling: pad only to a 16-row multiple, pick tile via cdiv -------
    b_pad = _round_up(max(b, SUBLANES), SUBLANES)
    num_tiles = _cdiv(b_pad, TB_MAX)
    if b_pad > SUBLANES:
        # >=2 tiles (even) so both v7x TensorCores get work under "parallel".
        num_tiles = max(num_tiles, 2)
    if num_tiles > 1 and num_tiles % 2:
        num_tiles += 1
    tb = _round_up(_cdiv(b_pad, num_tiles), SUBLANES)
    num_tiles = _cdiv(b_pad, tb)
    b_pad = num_tiles * tb

    xp = x if b_pad == b else jnp.pad(x, ((0, b_pad - b), (0, 0)))   # f32, unpadded features

    tile_map = lambda i: (i, 0)        # activations walk the batch
    resident_map = lambda i: (0, 0)    # weights/biases: same block every step

    def w_spec(arr):
        return pl.BlockSpec(arr.shape, resident_map)

    flops = 2 * b_pad * (state_dim * H1 + H1 * H2 + H2 * H3 + H3 * adp)
    bytes_accessed = (
        xp.size * xp.dtype.itemsize
        + b_pad * action_dim * 4
        + sum(int(np.prod(v.shape)) * v.dtype.itemsize for v in pparams.values()))
    cost = pl.CostEstimate(flops=flops,
                           transcendentals=b_pad * adp,
                           bytes_accessed=bytes_accessed)

    out = pl.pallas_call(
        functools.partial(_policy_kernel, num_actions=action_dim),
        out_shape=jax.ShapeDtypeStruct((b_pad, action_dim), jnp.float32),
        grid_spec=pltpu.PrefetchScalarGridSpec(
            num_scalar_prefetch=0,
            grid=(num_tiles,),
            in_specs=[
                pl.BlockSpec((tb, state_dim), tile_map),
                w_spec(pparams["w1"]), w_spec(pparams["b1"]),
                w_spec(pparams["w2"]), w_spec(pparams["b2"]),
                w_spec(pparams["w3"]), w_spec(pparams["b3"]),
                w_spec(pparams["w4"]), w_spec(pparams["b4"]),
            ],
            out_specs=pl.BlockSpec((tb, action_dim), tile_map),
        ),
        compiler_params=pltpu.CompilerParams(
            # Batch tiles are independent -> shard across v7x's 2 TensorCores.
            dimension_semantics=("parallel",),
        ),
        cost_estimate=cost,
    )(xp,
      pparams["w1"], pparams["b1"],
      pparams["w2"], pparams["b2"],
      pparams["w3"], pparams["b3"],
      pparams["w4"], pparams["b4"])

    return out if b_pad == b else out[:b]


def reference_forward(x, params):
    """Pure-JAX reference mirroring the kernel's bf16-input / f32-accumulate numerics."""
    f32 = jnp.float32
    q = lambda a: a.astype(jnp.bfloat16)
    h = jnp.maximum(jnp.dot(q(x), q(params["w1"]), preferred_element_type=f32)
                    + params["b1"], 0.0)
    h = jnp.maximum(jnp.dot(q(h), q(params["w2"]), preferred_element_type=f32)
                    + params["b2"], 0.0)
    h = jnp.maximum(jnp.dot(q(h), q(params["w3"]), preferred_element_type=f32)
                    + params["b3"], 0.0)
    logits = (jnp.dot(q(h), q(params["w4"]), preferred_element_type=f32)
              + params["b4"])
    return jax.nn.softmax(logits, axis=-1)


if __name__ == "__main__":
    state_dim = 32
    action_dim = 8
    batch = 2

    key = jax.random.PRNGKey(0)
    k_params, k_x = jax.random.split(key)

    params = init_params(k_params, state_dim, action_dim)
    pparams = prepare_params(params, state_dim, action_dim)
    x = jax.random.normal(k_x, (batch, state_dim), dtype=jnp.float32)

    out = smart_policy_forward(x, pparams, action_dim)
    out = jax.block_until_ready(out)

    ref = reference_forward(x, params)
    np.testing.assert_allclose(np.asarray(out), np.asarray(ref), rtol=2e-3, atol=2e-3)
    # Softmax rows must sum to 1 (padded action lanes contribute exactly 0;
    # approx reciprocal keeps this within ~1e-3).
    np.testing.assert_allclose(np.asarray(out).sum(axis=-1), np.ones(batch),
                               rtol=2e-3, atol=2e-3)

    print("KERNEL_OK")
</pallas_src>

<mosaic_0001>
module attributes {stable_mosaic.version = 11 : i64} {
  func.func @_policy_kernel(%arg0: i32, %arg1: memref<16x32xf32, #tpu.memory_space<vmem>>, %arg2: memref<32x256xbf16, #tpu.memory_space<vmem>>, %arg3: memref<1x256xf32, #tpu.memory_space<vmem>>, %arg4: memref<256x128xbf16, #tpu.memory_space<vmem>>, %arg5: memref<1x128xf32, #tpu.memory_space<vmem>>, %arg6: memref<128x64xbf16, #tpu.memory_space<vmem>>, %arg7: memref<1x64xf32, #tpu.memory_space<vmem>>, %arg8: memref<64x128xbf16, #tpu.memory_space<vmem>>, %arg9: memref<1x128xf32, #tpu.memory_space<vmem>>, %arg10: memref<16x8xf32, #tpu.memory_space<vmem>>) attributes {dimension_semantics = [#tpu.dimension_semantics<parallel>], iteration_bounds = array<i64: 1>, scalar_prefetch = 0 : i64, scratch_operands = 0 : i64, tpu.core_type = #tpu.core_type<tc>, window_params = [{transform_indices = @transform_0, window_bounds = array<i64: 16, 32>}, {pipeline_mode = #tpu.pipeline_mode<synchronous>, transform_indices = @transform_1, window_bounds = array<i64: 32, 256>}, {pipeline_mode = #tpu.pipeline_mode<synchronous>, transform_indices = @transform_2, window_bounds = array<i64: 1, 256>}, {pipeline_mode = #tpu.pipeline_mode<synchronous>, transform_indices = @transform_3, window_bounds = array<i64: 256, 128>}, {pipeline_mode = #tpu.pipeline_mode<synchronous>, transform_indices = @transform_4, window_bounds = array<i64: 1, 128>}, {pipeline_mode = #tpu.pipeline_mode<synchronous>, transform_indices = @transform_5, window_bounds = array<i64: 128, 64>}, {pipeline_mode = #tpu.pipeline_mode<synchronous>, transform_indices = @transform_6, window_bounds = array<i64: 1, 64>}, {pipeline_mode = #tpu.pipeline_mode<synchronous>, transform_indices = @transform_7, window_bounds = array<i64: 64, 128>}, {pipeline_mode = #tpu.pipeline_mode<synchronous>, transform_indices = @transform_8, window_bounds = array<i64: 1, 128>}, {transform_indices = @transform_9, window_bounds = array<i64: 16, 8>}]} {
    %c0 = arith.constant 0 : index
    %c0_0 = arith.constant 0 : index
    %0 = vector.load %arg1[%c0, %c0_0] : memref<16x32xf32, #tpu.memory_space<vmem>>, vector<16x32xf32>
    %1 = arith.truncf %0 : vector<16x32xf32> to vector<16x32xbf16>
    %c0_1 = arith.constant 0 : index
    %c0_2 = arith.constant 0 : index
    %2 = vector.load %arg2[%c0_1, %c0_2] : memref<32x256xbf16, #tpu.memory_space<vmem>>, vector<32x256xbf16>
    %cst = arith.constant dense<0.000000e+00> : vector<16x256xf32>
    %3 = tpu.matmul %1, %2, %cst {dimension_numbers = #tpu.dot_dimension_numbers<[1], [0], [0], [1], [0, 0, 1, 1], [], []>} : vector<16x32xbf16>, vector<32x256xbf16>, vector<16x256xf32> -> vector<16x256xf32>
    %c0_3 = arith.constant 0 : index
    %c0_4 = arith.constant 0 : index
    %4 = vector.load %arg3[%c0_3, %c0_4] : memref<1x256xf32, #tpu.memory_space<vmem>>, vector<1x256xf32>
    %5 = vector.broadcast %4 : vector<1x256xf32> to vector<16x256xf32>
    %6 = arith.addf %3, %5 : vector<16x256xf32>
    %cst_5 = arith.constant 0.000000e+00 : f32
    %7 = vector.broadcast %cst_5 : f32 to vector<16x256xf32>
    %8 = arith.maximumf %6, %7 : vector<16x256xf32>
    %9 = arith.truncf %8 : vector<16x256xf32> to vector<16x256xbf16>
    %c0_6 = arith.constant 0 : index
    %c0_7 = arith.constant 0 : index
    %10 = vector.load %arg4[%c0_6, %c0_7] : memref<256x128xbf16, #tpu.memory_space<vmem>>, vector<256x128xbf16>
    %cst_8 = arith.constant dense<0.000000e+00> : vector<16x128xf32>
    %11 = tpu.matmul %9, %10, %cst_8 {dimension_numbers = #tpu.dot_dimension_numbers<[1], [0], [0], [1], [0, 0, 1, 1], [], []>} : vector<16x256xbf16>, vector<256x128xbf16>, vector<16x128xf32> -> vector<16x128xf32>
    %c0_9 = arith.constant 0 : index
    %c0_10 = arith.constant 0 : index
    %12 = vector.load %arg5[%c0_9, %c0_10] : memref<1x128xf32, #tpu.memory_space<vmem>>, vector<1x128xf32>
    %13 = vector.broadcast %12 : vector<1x128xf32> to vector<16x128xf32>
    %14 = arith.addf %11, %13 : vector<16x128xf32>
    %cst_11 = arith.constant 0.000000e+00 : f32
    %15 = vector.broadcast %cst_11 : f32 to vector<16x128xf32>
    %16 = arith.maximumf %14, %15 : vector<16x128xf32>
    %17 = arith.truncf %16 : vector<16x128xf32> to vector<16x128xbf16>
    %c0_12 = arith.constant 0 : index
    %c0_13 = arith.constant 0 : index
    %18 = vector.load %arg6[%c0_12, %c0_13] : memref<128x64xbf16, #tpu.memory_space<vmem>>, vector<128x64xbf16>
    %cst_14 = arith.constant dense<0.000000e+00> : vector<16x64xf32>
    %19 = tpu.matmul %17, %18, %cst_14 {dimension_numbers = #tpu.dot_dimension_numbers<[1], [0], [0], [1], [0, 0, 1, 1], [], []>} : vector<16x128xbf16>, vector<128x64xbf16>, vector<16x64xf32> -> vector<16x64xf32>
    %c0_15 = arith.constant 0 : index
    %c0_16 = arith.constant 0 : index
    %20 = vector.load %arg7[%c0_15, %c0_16] : memref<1x64xf32, #tpu.memory_space<vmem>>, vector<1x64xf32>
    %21 = vector.broadcast %20 : vector<1x64xf32> to vector<16x64xf32>
    %22 = arith.addf %19, %21 : vector<16x64xf32>
    %cst_17 = arith.constant 0.000000e+00 : f32
    %23 = vector.broadcast %cst_17 : f32 to vector<16x64xf32>
    %24 = arith.maximumf %22, %23 : vector<16x64xf32>
    %25 = arith.truncf %24 : vector<16x64xf32> to vector<16x64xbf16>
    %c0_18 = arith.constant 0 : index
    %c0_19 = arith.constant 0 : index
    %26 = vector.load %arg8[%c0_18, %c0_19] : memref<64x128xbf16, #tpu.memory_space<vmem>>, vector<64x128xbf16>
    %cst_20 = arith.constant dense<0.000000e+00> : vector<16x128xf32>
    %27 = tpu.matmul %25, %26, %cst_20 {dimension_numbers = #tpu.dot_dimension_numbers<[1], [0], [0], [1], [0, 0, 1, 1], [], []>} : vector<16x64xbf16>, vector<64x128xbf16>, vector<16x128xf32> -> vector<16x128xf32>
    %c0_21 = arith.constant 0 : index
    %c0_22 = arith.constant 0 : index
    %28 = vector.load %arg9[%c0_21, %c0_22] : memref<1x128xf32, #tpu.memory_space<vmem>>, vector<1x128xf32>
    %29 = vector.broadcast %28 : vector<1x128xf32> to vector<16x128xf32>
    %30 = arith.addf %27, %29 : vector<16x128xf32>
    %cst_23 = arith.constant dense<0xFF800000> : vector<16xf32>
    %31 = vector.multi_reduction <maximumf>, %30, %cst_23 [1] : vector<16x128xf32> to vector<16xf32>
    %32 = vector.shape_cast %31 : vector<16xf32> to vector<16x1xf32>
    %33 = vector.broadcast %32 : vector<16x1xf32> to vector<16x128xf32>
    %34 = arith.subf %30, %33 : vector<16x128xf32>
    %35 = math.exp %34 : vector<16x128xf32>
    %cst_24 = arith.constant dense<0.000000e+00> : vector<16xf32>
    %36 = vector.multi_reduction <add>, %35, %cst_24 [1] : vector<16x128xf32> to vector<16xf32>
    %37 = vector.shape_cast %36 : vector<16xf32> to vector<16x1xf32>
    %38 = tpu.reciprocal %37 {approx = true} : vector<16x1xf32> -> vector<16x1xf32>
    %39 = vector.broadcast %38 : vector<16x1xf32> to vector<16x128xf32>
    %40 = arith.mulf %35, %39 : vector<16x128xf32>
    %41 = vector.extract_strided_slice %40 {offsets = [0, 0], sizes = [16, 8], strides = [1, 1]} : vector<16x128xf32> to vector<16x8xf32>
    %c0_25 = arith.constant 0 : index
    %c0_26 = arith.constant 0 : index
    %42 = vector.load %arg10[%c0_25, %c0_26] : memref<16x8xf32, #tpu.memory_space<vmem>>, vector<16x8xf32>
    tpu.vector_store %arg10[%c0_25, %c0_26], %41 {strides = array<i32>} : memref<16x8xf32, #tpu.memory_space<vmem>>, vector<16x8xf32>,
    return
  }
  func.func @transform_0(%arg0: i32) -> (i32, i32) {
    %c0_i32 = arith.constant 0 : i32
    %c0_i32_0 = arith.constant 0 : i32
    return %arg0, %c0_i32 : i32, i32
  }
  func.func @transform_1(%arg0: i32) -> (i32, i32) {
    %c0_i32 = arith.constant 0 : i32
    %c0_i32_0 = arith.constant 0 : i32
    %c0_i32_1 = arith.constant 0 : i32
    return %c0_i32, %c0_i32_0 : i32, i32
  }
  func.func @transform_2(%arg0: i32) -> (i32, i32) {
    %c0_i32 = arith.constant 0 : i32
    %c0_i32_0 = arith.constant 0 : i32
    %c0_i32_1 = arith.constant 0 : i32
    return %c0_i32, %c0_i32_0 : i32, i32
  }
  func.func @transform_3(%arg0: i32) -> (i32, i32) {
    %c0_i32 = arith.constant 0 : i32
    %c0_i32_0 = arith.constant 0 : i32
    %c0_i32_1 = arith.constant 0 : i32
    return %c0_i32, %c0_i32_0 : i32, i32
  }
  func.func @transform_4(%arg0: i32) -> (i32, i32) {
    %c0_i32 = arith.constant 0 : i32
    %c0_i32_0 = arith.constant 0 : i32
    %c0_i32_1 = arith.constant 0 : i32
    return %c0_i32, %c0_i32_0 : i32, i32
  }
  func.func @transform_5(%arg0: i32) -> (i32, i32) {
    %c0_i32 = arith.constant 0 : i32
    %c0_i32_0 = arith.constant 0 : i32
    %c0_i32_1 = arith.constant 0 : i32
    return %c0_i32, %c0_i32_0 : i32, i32
  }
  func.func @transform_6(%arg0: i32) -> (i32, i32) {
    %c0_i32 = arith.constant 0 : i32
    %c0_i32_0 = arith.constant 0 : i32
    %c0_i32_1 = arith.constant 0 : i32
    return %c0_i32, %c0_i32_0 : i32, i32
  }
  func.func @transform_7(%arg0: i32) -> (i32, i32) {
    %c0_i32 = arith.constant 0 : i32
    %c0_i32_0 = arith.constant 0 : i32
    %c0_i32_1 = arith.constant 0 : i32
    return %c0_i32, %c0_i32_0 : i32, i32
  }
  func.func @transform_8(%arg0: i32) -> (i32, i32) {
    %c0_i32 = arith.constant 0 : i32
    %c0_i32_0 = arith.constant 0 : i32
    %c0_i32_1 = arith.constant 0 : i32
    return %c0_i32, %c0_i32_0 : i32, i32
  }
  func.func @transform_9(%arg0: i32) -> (i32, i32) {
    %c0_i32 = arith.constant 0 : i32
    %c0_i32_0 = arith.constant 0 : i32
    return %arg0, %c0_i32 : i32, i32
  }
}

</mosaic_0001>

<llo_original>
// kernel: smart_policy_forward.1
$region0: #{smart_policy_forward.1}
  #allocation0 [shape = 'u32[]', space=smem, size = 0x4, offset = 0x4, fixed_abs, tag = 'smem constant byte address 0x4 - core index']
  #allocation1 [shape = 'u32[144,128]{1,0:T(1,128)}', space=vmem, size = 0x12000, scoped, tag = 'internal scratch']
  %s0 = inlined_call_operand.vmem [shape: f32[16,32], index: 0, kind: input, shape index: {}]
  %s1 = inlined_call_operand.vmem [shape: bf16[32,256], index: 1, kind: input, shape index: {}]
  %s2 = inlined_call_operand.vmem [shape: f32[1,256], index: 2, kind: input, shape index: {}]
  %s3 = inlined_call_operand.hbm [shape: bf16[256,128], index: 3, kind: input, shape index: {}]
  %s4 = inlined_call_operand.vmem [shape: f32[1,128], index: 4, kind: input, shape index: {}]
  %s5 = inlined_call_operand.vmem [shape: bf16[128,64], index: 5, kind: input, shape index: {}]
  %s6 = inlined_call_operand.vmem [shape: f32[1,64], index: 6, kind: input, shape index: {}]
  %s7 = inlined_call_operand.vmem [shape: bf16[64,128], index: 7, kind: input, shape index: {}]
  %s8 = inlined_call_operand.vmem [shape: f32[1,128], index: 8, kind: input, shape index: {}]
  %s9 = inlined_call_operand.vmem [shape: f32[16,8], index: 9, kind: output, shape index: {}]
  %s10 = sld [smem:[#allocation0]]
  $region50: #{smart_policy_forward.1} parent=0
    _
  %s12 = ssub.s32 1, %s10
  %s13 = scalar_select 0, %s12, %s10
  $region1: #{smart_policy_forward.1} parent=0
    #allocation2 [shape = 'u8[65536]{0}', space=vmem, size = 0x10000, scoped, tag = 'input window, operand 3, single buffered']
    #allocation3 [shape = 's32[1]{0}', space=sflag, size = 0x4, scoped, tag = 'scoped memory for smart_policy_forward.1']
    %14 = vsyncpa [#allocation3], 0
    // Predicated region
    $region2: #{smart_policy_forward.1} parent=1 // pred_check
      _
    $region3: #{smart_policy_forward.1} parent=1 // pred_check_branch
      %16 = sbr.rel (0) target = $region5
    $region4: #{smart_policy_forward.1} parent=1 // pred_region
      _
    $region5: #{smart_policy_forward.1} parent=1 // pred_fallthru
      _
    // Predicated region
    $region6: #{smart_policy_forward.1} parent=1 // pred_check
      _
    $region7: #{smart_policy_forward.1} parent=1 // pred_check_branch
      %18 = sbr.rel (0) target = $region9
    $region8: #{smart_policy_forward.1} parent=1 // pred_region
      _
    $region9: #{smart_policy_forward.1} parent=1 // pred_fallthru
      _
    // Predicated region
    $region10: #{smart_policy_forward.1} parent=1 // pred_check
      _
    $region11: #{smart_policy_forward.1} parent=1 // pred_check_branch
      %20 = sbr.rel (0) target = $region13
    $region12: #{smart_policy_forward.1} parent=1 // pred_region
      _
    $region13: #{smart_policy_forward.1} parent=1 // pred_fallthru
      _
    // Predicated region
    $region14: #{smart_policy_forward.1} parent=1 // pred_check
      _
    $region15: #{smart_policy_forward.1} parent=1 // pred_check_branch
      %22 = sbr.rel (0) target = $region17
    $region16: #{smart_policy_forward.1} parent=1 // pred_region
      %s24 = ssub.s32 2048, 2048
      %25 = vsyncadd [#allocation3], %s24
      %s26 = sshll.u32 [#allocation2], 4
      %s27 = int_to_ptr.vmem [resolvable:$true] %s26
      %32 = dma.hbm_to_vmem [thread:$0]  %s3, 2048, %s27, [#allocation3], 64, 64, 4
    $region17: #{smart_policy_forward.1} parent=1 // pred_fallthru
      _
    // Predicated region
    $region18: #{smart_policy_forward.1} parent=1 // pred_check
      _
    $region19: #{smart_policy_forward.1} parent=1 // pred_check_branch
      %34 = sbr.rel (0) target = $region21
    $region20: #{smart_policy_forward.1} parent=1 // pred_region
      _
    $region21: #{smart_policy_forward.1} parent=1 // pred_fallthru
      _
    // Predicated region
    $region22: #{smart_policy_forward.1} parent=1 // pred_check
      _
    $region23: #{smart_policy_forward.1} parent=1 // pred_check_branch
      %36 = sbr.rel (0) target = $region25
    $region24: #{smart_policy_forward.1} parent=1 // pred_region
      _
    $region25: #{smart_policy_forward.1} parent=1 // pred_fallthru
      _
    // Predicated region
    $region26: #{smart_policy_forward.1} parent=1 // pred_check
      _
    $region27: #{smart_policy_forward.1} parent=1 // pred_check_branch
      %38 = sbr.rel (0) target = $region29
    $region28: #{smart_policy_forward.1} parent=1 // pred_region
      _
    $region29: #{smart_policy_forward.1} parent=1 // pred_fallthru
      _
    // Predicated region
    $region30: #{smart_policy_forward.1} parent=1 // pred_check
      _
    $region31: #{smart_policy_forward.1} parent=1 // pred_check_branch
      %40 = sbr.rel (0) target = $region33
    $region32: #{smart_policy_forward.1} parent=1 // pred_region
      _
    $region33: #{smart_policy_forward.1} parent=1 // pred_fallthru
      _
    // Predicated region
    $region34: #{smart_policy_forward.1} parent=1 // pred_check
      _
    $region35: #{smart_policy_forward.1} parent=1 // pred_check_branch
      %42 = sbr.rel (0) target = $region37
    $region36: #{smart_policy_forward.1} parent=1 // pred_region
      _
    $region37: #{smart_policy_forward.1} parent=1 // pred_fallthru
      _
    // Predicated region
    $region38: #{smart_policy_forward.1} parent=1 // pred_check
      _
    $region39: #{smart_policy_forward.1} parent=1 // pred_check_branch
      %44 = sbr.rel (0) target = $region41
    $region40: #{smart_policy_forward.1} parent=1 // pred_region
      %45 = dma.done [#allocation3], 2048
    $region41: #{smart_policy_forward.1} parent=1 // pred_fallthru
      _
    %v47 = vld [vmem:[%s0] sm:$0xff]
    %v48 = vld [vmem:[%s0 + $0x8] sm:$0xff]
    %v49 = vpack.c.bf16 %v48, %v47
    %v50 = vld [vmem:[%s1] sm:$0xff]
    %v51 = vld [vmem:[%s1 + $0x8] sm:$0xff]
    %v52 = vld [vmem:[%s1 + $0x10] sm:$0xff]
    %v53 = vld [vmem:[%s1 + $0x18] sm:$0xff]
    %v54 = vld [vmem:[%s2] sm:$0x3]
    %v56 = vlaneseq
    %v57 = vshrl.u32 %v56, 7
    %v58 = vsub.s32 0, %v57
    %v59 = vrot.slane %v54, %v58
    %v60 = vlaneseq
    %v61 = vshrl.u32 %v60, 7
    %v62 = vsub.s32 1, %v61
    %v63 = vrot.slane %v54, %v62
    %v70 = vunpack.c.l.b16 %v50
    %v71 = vunpack.c.h.b16 %v50
    %v72 = vunpack.c.l.b16 %v51
    %v73 = vunpack.c.h.b16 %v51
    %v74 = vunpack.c.l.b16 %v52
    %v75 = vunpack.c.h.b16 %v52
    %v76 = vunpack.c.l.b16 %v53
    %v77 = vunpack.c.h.b16 %v53
    %v78 = vpack.c.b16 %v72, %v70
    %v79 = vpack.c.b16 %v73, %v71
    %v80 = vpack.c.b16 %v76, %v74
    %v81 = vpack.c.b16 %v77, %v75
    %vm86 = vcmask 261120
    %v88 = vsel %vm86, %v49, 0
    %90 = vmatprep.subr.bf16.mxu0 0
    %91 = vmatpush1.bf16.msra.mxu0 0
    %92 = vmatprep.subr.bf16.mxu0 0
    %93 = vmatpush1.bf16.msra.mxu0 0
    %94 = vmatprep.subr.bf16.mxu0 0
    %95 = vmatpush1.bf16.msra.mxu0 0
    %96 = vmatprep.subr.bf16.mxu0 0
    %97 = vmatpush1.bf16.msra.mxu0 0
    %98 = vmatprep.subr.bf16.mxu0 0
    %99 = vmatpush1.bf16.msra.mxu0 0
    %100 = vmatprep.subr.bf16.mxu0 0
    %101 = vmatpush1.bf16.msra.mxu0 0
    %102 = vmatprep.subr.bf16.mxu0 %v81
    %103 = vmatpush1.bf16.msra.mxu0 %v80
    %104 = vmatprep.subr.bf16.mxu0 %v79
    %105 = vmatpush1.bf16.msra.mxu0 %v78
    %106 = vmatprep.subr.bf16.mxu0 0
    %107 = vmatpush2.bf16.msra.mxu0 0
    %108 = vmatprep.subr.bf16.mxu0 0
    %109 = vmatpush2.bf16.msra.mxu0 0
    %110 = vmatprep.subr.bf16.mxu0 0
    %111 = vmatpush2.bf16.msra.mxu0 0
    %112 = vmatprep.subr.bf16.mxu0 0
    %113 = vmatpush2.bf16.msra.mxu0 0
    %114 = vmatprep.subr.bf16.mxu0 0
    %115 = vmatpush2.bf16.msra.mxu0 0
    %116 = vmatprep.subr.bf16.mxu0 0
    %117 = vmatpush2.bf16.msra.mxu0 0
    %118 = vmatprep.subr.bf16.mxu0 0
    %119 = vmatpush2.bf16.msra.mxu0 0
    %120 = vmatprep.subr.bf16.mxu0 0
    %121 = vmatpush2.bf16.msra.mxu0 0
    %122 = vmatprep.mubr.bf16.mxu0 0
    %123 = vmatmul.mubr.bf16.gmra.mxu0 %v88
    %v124 = vpop.f32.mrf.mxu0
    %v125 = vadd.f32 %v59, %v124
    %v126 = vpop.f32.mrf.mxu0
    %v127 = vadd.f32 %v63, %v126
    %v128 = vpop.f32.mrf.mxu0
    %v129 = vadd.f32 %v59, %v128
    %v130 = vpop.f32.mrf.mxu0
    %v131 = vadd.f32 %v63, %v130
    %132 = vdwg.mxu0
    %v133 = vmax.f32 %v125, 0.0
    %v134 = vmax.f32 %v127, 0.0
    %v135 = vmax.f32 %v129, 0.0
    %v136 = vmax.f32 %v131, 0.0
    %v137 = vpack.c.bf16 %v135, %v133
    %v138 = vpack.c.bf16 %v136, %v134
    %v139 = vld [vmem:[#allocation2] sm:$0xf]
    %v140 = vld [vmem:[#allocation2 + $0x4] sm:$0xf]
    %v141 = vld [vmem:[#allocation2 + $0x8] sm:$0xf]
    %v142 = vld [vmem:[#allocation2 + $0xc] sm:$0xf]
    %v143 = vld [vmem:[#allocation2 + $0x10] sm:$0xf]
    %v144 = vld [vmem:[#allocation2 + $0x14] sm:$0xf]
    %v145 = vld [vmem:[#allocation2 + $0x18] sm:$0xf]
    %v146 = vld [vmem:[#allocation2 + $0x1c] sm:$0xf]
    %v147 = vld [vmem:[#allocation2 + $0x20] sm:$0xf]
    %v148 = vld [vmem:[#allocation2 + $0x24] sm:$0xf]
    %v149 = vld [vmem:[#allocation2 + $0x28] sm:$0xf]
    %v150 = vld [vmem:[#allocation2 + $0x2c] sm:$0xf]
    %v151 = vld [vmem:[#allocation2 + $0x30] sm:$0xf]
    %v152 = vld [vmem:[#allocation2 + $0x34] sm:$0xf]
    %v153 = vld [vmem:[#allocation2 + $0x38] sm:$0xf]
    %v154 = vld [vmem:[#allocation2 + $0x3c] sm:$0xf]
    %v155 = vld [vmem:[#allocation2 + $0x40] sm:$0xf]
    %v156 = vld [vmem:[#allocation2 + $0x44] sm:$0xf]
    %v157 = vld [vmem:[#allocation2 + $0x48] sm:$0xf]
    %v158 = vld [vmem:[#allocation2 + $0x4c] sm:$0xf]
    %v159 = vld [vmem:[#allocation2 + $0x50] sm:$0xf]
    %v160 = vld [vmem:[#allocation2 + $0x54] sm:$0xf]
    %v161 = vld [vmem:[#allocation2 + $0x58] sm:$0xf]
    %v162 = vld [vmem:[#allocation2 + $0x5c] sm:$0xf]
    %v163 = vld [vmem:[#allocation2 + $0x60] sm:$0xf]
    %v164 = vld [vmem:[#allocation2 + $0x64] sm:$0xf]
    %v165 = vld [vmem:[#allocation2 + $0x68] sm:$0xf]
    %v166 = vld [vmem:[#allocation2 + $0x6c] sm:$0xf]
    %v167 = vld [vmem:[#allocation2 + $0x70] sm:$0xf]
    %v168 = vld [vmem:[#allocation2 + $0x74] sm:$0xf]
    %v169 = vld [vmem:[#allocation2 + $0x78] sm:$0xf]
    %v170 = vld [vmem:[#allocation2 + $0x7c] sm:$0xf]
    %v171 = vld [vmem:[%s4] sm:$0x1]
    %v173 = vlaneseq
    %v174 = vshrl.u32 %v173, 7
    %v175 = vsub.s32 0, %v174
    %v176 = vrot.slane %v171, %v175
    %v210 = vunpack.c.l.b16 %v139
    %v211 = vunpack.c.l.b16 %v140
    %v212 = vunpack.c.l.b16 %v141
    %v213 = vunpack.c.l.b16 %v142
    %v214 = vunpack.c.l.b16 %v143
    %v215 = vunpack.c.l.b16 %v144
    %v216 = vunpack.c.l.b16 %v145
    %v217 = vunpack.c.l.b16 %v146
    %v218 = vunpack.c.l.b16 %v147
    %v219 = vunpack.c.l.b16 %v148
    %v220 = vunpack.c.l.b16 %v149
    %v221 = vunpack.c.l.b16 %v150
    %v222 = vunpack.c.l.b16 %v151
    %v223 = vunpack.c.l.b16 %v152
    %v224 = vunpack.c.l.b16 %v153
    %v225 = vunpack.c.l.b16 %v154
    %v226 = vunpack.c.l.b16 %v155
    %v227 = vunpack.c.l.b16 %v156
    %v228 = vunpack.c.l.b16 %v157
    %v229 = vunpack.c.l.b16 %v158
    %v230 = vunpack.c.l.b16 %v159
    %v231 = vunpack.c.l.b16 %v160
    %v232 = vunpack.c.l.b16 %v161
    %v233 = vunpack.c.l.b16 %v162
    %v234 = vunpack.c.l.b16 %v163
    %v235 = vunpack.c.l.b16 %v164
    %v236 = vunpack.c.l.b16 %v165
    %v237 = vunpack.c.l.b16 %v166
    %v238 = vunpack.c.l.b16 %v167
    %v239 = vunpack.c.l.b16 %v168
    %v240 = vunpack.c.l.b16 %v169
    %v241 = vunpack.c.l.b16 %v170
    %v242 = vpack.c.b16 %v211, %v210
    %v243 = vpack.c.b16 %v213, %v212
    %v244 = vpack.c.b16 %v215, %v214
    %v245 = vpack.c.b16 %v217, %v216
    %v246 = vpack.c.b16 %v219, %v218
    %v247 = vpack.c.b16 %v221, %v220
    %v248 = vpack.c.b16 %v223, %v222
    %v249 = vpack.c.b16 %v225, %v224
    %v250 = vpack.c.b16 %v227, %v226
    %v251 = vpack.c.b16 %v229, %v228
    %v252 = vpack.c.b16 %v231, %v230
    %v253 = vpack.c.b16 %v233, %v232
    %v254 = vpack.c.b16 %v235, %v234
    %v255 = vpack.c.b16 %v237, %v236
    %v256 = vpack.c.b16 %v239, %v238
    %v257 = vpack.c.b16 %v241, %v240
    %274 = vmatprep.subr.bf16.mxu0 0
    %275 = vmatpush1.bf16.msra.mxu0 %v249
    %276 = vmatprep.subr.bf16.mxu0 0
    %277 = vmatpush1.bf16.msra.mxu0 %v248
    %278 = vmatprep.subr.bf16.mxu0 0
    %279 = vmatpush1.bf16.msra.mxu0 %v247
    %280 = vmatprep.subr.bf16.mxu0 0
    %281 = vmatpush1.bf16.msra.mxu0 %v246
    %282 = vmatprep.subr.bf16.mxu0 0
    %283 = vmatpush1.bf16.msra.mxu0 %v245
    %284 = vmatprep.subr.bf16.mxu0 0
    %285 = vmatpush1.bf16.msra.mxu0 %v244
    %286 = vmatprep.subr.bf16.mxu0 0
    %287 = vmatpush1.bf16.msra.mxu0 %v243
    %288 = vmatprep.subr.bf16.mxu0 0
    %289 = vmatpush1.bf16.msra.mxu0 %v242
    %290 = vmatprep.subr.bf16.mxu0 0
    %291 = vmatpush2.bf16.msra.mxu0 %v257
    %292 = vmatprep.subr.bf16.mxu0 0
    %293 = vmatpush2.bf16.msra.mxu0 %v256
    %294 = vmatprep.subr.bf16.mxu0 0
    %295 = vmatpush2.bf16.msra.mxu0 %v255
    %296 = vmatprep.subr.bf16.mxu0 0
    %297 = vmatpush2.bf16.msra.mxu0 %v254
    %298 = vmatprep.subr.bf16.mxu0 0
    %299 = vmatpush2.bf16.msra.mxu0 %v253
    %300 = vmatprep.subr.bf16.mxu0 0
    %301 = vmatpush2.bf16.msra.mxu0 %v252
    %302 = vmatprep.subr.bf16.mxu0 0
    %303 = vmatpush2.bf16.msra.mxu0 %v251
    %304 = vmatprep.subr.bf16.mxu0 0
    %305 = vmatpush2.bf16.msra.mxu0 %v250
    %306 = vmatprep.mubr.bf16.mxu0 %v138
    %307 = vmatmul.mubr.bf16.gmra.mxu0 %v137
    %v308 = vpop.f32.mrf.mxu0
    %v309 = vadd.f32 %v176, %v308
    %v310 = vpop.f32.mrf.mxu0
    %v311 = vpop.f32.mrf.mxu0
    %v312 = vadd.f32 %v176, %v311
    %v313 = vpop.f32.mrf.mxu0
    %314 = vdwg.mxu0
    %v315 = vmax.f32 %v309, 0.0
    %v316 = vmax.f32 %v312, 0.0
    %v317 = vpack.c.bf16 %v316, %v315
    %v318 = vld [vmem:[%s5] sm:$0xf]
    %v319 = vld [vmem:[%s5 + $0x4] sm:$0xf]
    %v320 = vld [vmem:[%s5 + $0x8] sm:$0xf]
    %v321 = vld [vmem:[%s5 + $0xc] sm:$0xf]
    %v322 = vld [vmem:[%s5 + $0x10] sm:$0xf]
    %v323 = vld [vmem:[%s5 + $0x14] sm:$0xf]
    %v324 = vld [vmem:[%s5 + $0x18] sm:$0xf]
    %v325 = vld [vmem:[%s5 + $0x1c] sm:$0xf]
    %v326 = vld [vmem:[%s5 + $0x20] sm:$0xf]
    %v327 = vld [vmem:[%s5 + $0x24] sm:$0xf]
    %v328 = vld [vmem:[%s5 + $0x28] sm:$0xf]
    %v329 = vld [vmem:[%s5 + $0x2c] sm:$0xf]
    %v330 = vld [vmem:[%s5 + $0x30] sm:$0xf]
    %v331 = vld [vmem:[%s5 + $0x34] sm:$0xf]
    %v332 = vld [vmem:[%s5 + $0x38] sm:$0xf]
    %v333 = vld [vmem:[%s5 + $0x3c] sm:$0xf]
    %v334 = vld [vmem:[%s6] sm:$0x1]
    %v336 = vlaneseq
    %v337 = vshrl.u32 %v336, 7
    %v338 = vsub.s32 0, %v337
    %v339 = vrot.slane %v334, %v338
    %v357 = vunpack.c.l.b16 %v318
    %v358 = vunpack.c.l.b16 %v319
    %v359 = vunpack.c.l.b16 %v320
    %v360 = vunpack.c.l.b16 %v321
    %v361 = vunpack.c.l.b16 %v322
    %v362 = vunpack.c.l.b16 %v323
    %v363 = vunpack.c.l.b16 %v324
    %v364 = vunpack.c.l.b16 %v325
    %v365 = vunpack.c.l.b16 %v326
    %v366 = vunpack.c.l.b16 %v327
    %v367 = vunpack.c.l.b16 %v328
    %v368 = vunpack.c.l.b16 %v329
    %v369 = vunpack.c.l.b16 %v330
    %v370 = vunpack.c.l.b16 %v331
    %v371 = vunpack.c.l.b16 %v332
    %v372 = vunpack.c.l.b16 %v333
    %v373 = vpack.c.b16 %v358, %v357
    %v374 = vpack.c.b16 %v360, %v359
    %v375 = vpack.c.b16 %v362, %v361
    %v376 = vpack.c.b16 %v364, %v363
    %v377 = vpack.c.b16 %v366, %v365
    %v378 = vpack.c.b16 %v368, %v367
    %v379 = vpack.c.b16 %v370, %v369
    %v380 = vpack.c.b16 %v372, %v371
    %389 = vmatprep.subr.bf16.mxu0 0
    %390 = vmatpush1.bf16.msra.mxu0 %v380
    %391 = vmatprep.subr.bf16.mxu0 0
    %392 = vmatpush1.bf16.msra.mxu0 %v379
    %393 = vmatprep.subr.bf16.mxu0 0
    %394 = vmatpush1.bf16.msra.mxu0 %v378
    %395 = vmatprep.subr.bf16.mxu0 0
    %396 = vmatpush1.bf16.msra.mxu0 %v377
    %397 = vmatprep.subr.bf16.mxu0 0
    %398 = vmatpush1.bf16.msra.mxu0 %v376
    %399 = vmatprep.subr.bf16.mxu0 0
    %400 = vmatpush1.bf16.msra.mxu0 %v375
    %401 = vmatprep.subr.bf16.mxu0 0
    %402 = vmatpush1.bf16.msra.mxu0 %v374
    %403 = vmatprep.subr.bf16.mxu0 0
    %404 = vmatpush1.bf16.msra.mxu0 %v373
    %405 = vmatprep.subr.bf16.mxu0 0
    %406 = vmatpush2.bf16.msra.mxu0 0
    %407 = vmatprep.subr.bf16.mxu0 0
    %408 = vmatpush2.bf16.msra.mxu0 0
    %409 = vmatprep.subr.bf16.mxu0 0
    %410 = vmatpush2.bf16.msra.mxu0 0
    %411 = vmatprep.subr.bf16.mxu0 0
    %412 = vmatpush2.bf16.msra.mxu0 0
    %413 = vmatprep.subr.bf16.mxu0 0
    %414 = vmatpush2.bf16.msra.mxu0 0
    %415 = vmatprep.subr.bf16.mxu0 0
    %416 = vmatpush2.bf16.msra.mxu0 0
    %417 = vmatprep.subr.bf16.mxu0 0
    %418 = vmatpush2.bf16.msra.mxu0 0
    %419 = vmatprep.subr.bf16.mxu0 0
    %420 = vmatpush2.bf16.msra.mxu0 0
    %421 = vmatprep.mubr.bf16.mxu0 0
    %422 = vmatmul.mubr.bf16.gmra.mxu0 %v317
    %v423 = vpop.f32.mrf.mxu0
    %v424 = vadd.f32 %v339, %v423
    %v425 = vpop.f32.mrf.mxu0
    %v426 = vpop.f32.mrf.mxu0
    %v427 = vadd.f32 %v339, %v426
    %v428 = vpop.f32.mrf.mxu0
    %429 = vdwg.mxu0
    %v430 = vmax.f32 %v424, 0.0
    %v431 = vmax.f32 %v427, 0.0
    %v432 = vpack.c.bf16 %v431, %v430
    %v433 = vld [vmem:[%s7] sm:$0xf]
    %v434 = vld [vmem:[%s7 + $0x4] sm:$0xf]
    %v435 = vld [vmem:[%s7 + $0x8] sm:$0xf]
    %v436 = vld [vmem:[%s7 + $0xc] sm:$0xf]
    %v437 = vld [vmem:[%s7 + $0x10] sm:$0xf]
    %v438 = vld [vmem:[%s7 + $0x14] sm:$0xf]
    %v439 = vld [vmem:[%s7 + $0x18] sm:$0xf]
    %v440 = vld [vmem:[%s7 + $0x1c] sm:$0xf]
    %v441 = vld [vmem:[%s8] sm:$0x1]
    %v443 = vlaneseq
    %v444 = vshrl.u32 %v443, 7
    %v445 = vsub.s32 0, %v444
    %v446 = vrot.slane %v441, %v445
    %v456 = vunpack.c.l.b16 %v433
    %v457 = vunpack.c.l.b16 %v434
    %v458 = vunpack.c.l.b16 %v435
    %v459 = vunpack.c.l.b16 %v436
    %v460 = vunpack.c.l.b16 %v437
    %v461 = vunpack.c.l.b16 %v438
    %v462 = vunpack.c.l.b16 %v439
    %v463 = vunpack.c.l.b16 %v440
    %v464 = vpack.c.b16 %v457, %v456
    %v465 = vpack.c.b16 %v459, %v458
    %v466 = vpack.c.b16 %v461, %v460
    %v467 = vpack.c.b16 %v463, %v462
    %vm472 = vcmask 523264
    %v474 = vsel %vm472, %v432, 0
    %476 = vmatprep.subr.bf16.mxu0 0
    %477 = vmatpush1.bf16.msra.mxu0 0
    %478 = vmatprep.subr.bf16.mxu0 0
    %479 = vmatpush1.bf16.msra.mxu0 0
    %480 = vmatprep.subr.bf16.mxu0 0
    %481 = vmatpush1.bf16.msra.mxu0 0
    %482 = vmatprep.subr.bf16.mxu0 0
    %483 = vmatpush1.bf16.msra.mxu0 0
    %484 = vmatprep.subr.bf16.mxu0 0
    %485 = vmatpush1.bf16.msra.mxu0 %v467
    %486 = vmatprep.subr.bf16.mxu0 0
    %487 = vmatpush1.bf16.msra.mxu0 %v466
    %488 = vmatprep.subr.bf16.mxu0 0
    %489 = vmatpush1.bf16.msra.mxu0 %v465
    %490 = vmatprep.subr.bf16.mxu0 0
    %491 = vmatpush1.bf16.msra.mxu0 %v464
    %492 = vmatprep.subr.bf16.mxu0 0
    %493 = vmatpush2.bf16.msra.mxu0 0
    %494 = vmatprep.subr.bf16.mxu0 0
    %495 = vmatpush2.bf16.msra.mxu0 0
    %496 = vmatprep.subr.bf16.mxu0 0
    %497 = vmatpush2.bf16.msra.mxu0 0
    %498 = vmatprep.subr.bf16.mxu0 0
    %499 = vmatpush2.bf16.msra.mxu0 0
    %500 = vmatprep.subr.bf16.mxu0 0
    %501 = vmatpush2.bf16.msra.mxu0 0
    %502 = vmatprep.subr.bf16.mxu0 0
    %503 = vmatpush2.bf16.msra.mxu0 0
    %504 = vmatprep.subr.bf16.mxu0 0
    %505 = vmatpush2.bf16.msra.mxu0 0
    %506 = vmatprep.subr.bf16.mxu0 0
    %507 = vmatpush2.bf16.msra.mxu0 0
    %508 = vmatprep.mubr.bf16.mxu0 0
    %509 = vmatmul.mubr.bf16.gmra.mxu0 %v474
    %v510 = vpop.f32.mrf.mxu0
    %v511 = vadd.f32 %v446, %v510
    %v512 = vpop.f32.mrf.mxu0
    %v513 = vpop.f32.mrf.mxu0
    %v514 = vadd.f32 %v446, %v513
    %v515 = vpop.f32.mrf.mxu0
    %516 = vdwg.mxu0
    %517 = vmax.xlane.f32.xlu0 %v511
    %v518 = vpop.xlane.xlu0 %517
    %519 = vmax.xlane.f32.xlu0 %v514
    %v520 = vpop.xlane.xlu0 %519
    %v521 = vsub.f32 %v511, %v518
    %v522 = vsub.f32 %v514, %v520
    %v523 = vmul.f32 %v521, 1.442695
    %v524 = vpow.pop %v523
    %v525 = vmul.f32 %v522, 1.442695
    %v526 = vpow.pop %v525
    %527 = vadd.xlane.f32.xlu0 %v524
    %v528 = vpop.xlane.xlu0 %527
    %529 = vadd.xlane.f32.xlu0 %v526
    %v530 = vpop.xlane.xlu0 %529
    %v531 = vrcp.pop %v528
    %v532 = vrcp.pop %v530
    %v533 = vmul.f32 %v524, %v531
    %v534 = vmul.f32 %v526, %v532
    %vm535 = vcmask 64512
    %536 = vst.msk [vmem:[%s9] sm:$0xff] %vm535, %v533
    %537 = vst.msk [vmem:[%s9 + $0x8] sm:$0xff] %vm535, %v534
    // Predicated region
    $region42: #{smart_policy_forward.1} parent=1 // pred_check
      _
    $region43: #{smart_policy_forward.1} parent=1 // pred_check_branch
      %539 = sbr.rel (0) target = $region45
    $region44: #{smart_policy_forward.1} parent=1 // pred_region
      _
    $region45: #{smart_policy_forward.1} parent=1 // pred_fallthru
      _
    // Predicated region
    $region46: #{smart_policy_forward.1} parent=1 // pred_check
      _
    $region47: #{smart_policy_forward.1} parent=1 // pred_check_branch
      %541 = sbr.rel (0) target = $region49
    $region48: #{smart_policy_forward.1} parent=1 // pred_region
      _
    $region49: #{smart_policy_forward.1} parent=1 // pred_fallthru
      _
    %542 = vsyncpa [#allocation3], 1

</llo_original>
